<compile_context>
chip_gen: v7x
topology: tpu7x:2x2x1
jax: 0.10.0
libtpu: 0.0.40
codegen_flags: <defaults>
</compile_context>

<pallas_src>
import jax
import jax.numpy as jnp
from jax.experimental import pallas as pl
from jax.experimental.pallas import tpu as pltpu

_LANE = 128          # vreg lane width
_MAX_TILE = 65536    # max lane-tile width (multiple of 128)


def _point_mass_kernel(params_ref, p_ref, q_ref, f_ref, np_ref, nq_ref):
    # Scalar parameters from SMEM (scalar-unit reads, effectively free).
    Ts = params_ref[0]
    ts_over_m = params_ref[1]   # precomputed Ts / mass
    b1 = params_ref[2]
    b2 = params_ref[3]

    p = p_ref[...]              # (2, BN): rows = [x, y]
    q = q_ref[...]              # (2, BN)
    f = f_ref[...]              # (2, BN)

    # drag = b1 + b2 * ||q|| per vehicle (per lane): pure VPU mul/add + EUP
    # sqrt, no cross-lane XLU reduce.  (1, BN), broadcast over 2 sublanes.
    speed = jnp.sqrt(q[0:1, :] * q[0:1, :] + q[1:2, :] * q[1:2, :])
    cq = b1 + b2 * speed

    # Two direct full-block stores; no concatenate / sublane repacking.
    np_ref[...] = p + Ts * q
    nq_ref[...] = q + ts_over_m * (f - cq * q)


def point_mass_forward(p, q, F, *, mass, sampling_time,
                       drag_coefficient_1, drag_coefficient_2):
    """p, q, F: (2,) or (B, 2) float arrays. Returns (next_p, next_q) with the
    same shape as the inputs."""
    single = (p.ndim == 1)
    p2 = jnp.atleast_2d(p).astype(jnp.float32)   # (B, 2)
    q2 = jnp.atleast_2d(q).astype(jnp.float32)
    F2 = jnp.atleast_2d(F).astype(jnp.float32)
    B = p2.shape[0]

    # Lane-dense tiling: BN is a multiple of 128; Bp a multiple of BN.
    B_pad = pl.cdiv(B, _LANE) * _LANE
    if B_pad <= _LANE:
        BN = _LANE                               # tiny batch: single tile
    elif B_pad <= _MAX_TILE:
        # Fits in one max tile; split into ~2 grid steps so v7x's second
        # TensorCore also gets work (dimension_semantics="parallel").
        BN = max(_LANE, pl.cdiv(B_pad, 2 * _LANE) * _LANE)
    else:
        BN = _MAX_TILE
    Bp = pl.cdiv(B_pad, BN) * BN
    grid = (Bp // BN,)

    # Transpose to (2, B) and zero-pad lanes to Bp (padded q lanes are zero,
    # so sqrt(0) is safe).  No intermediate 8-row slab is materialized.
    pad = Bp - B
    pT = jnp.pad(p2.T, ((0, 0), (0, pad)))       # (2, Bp)
    qT = jnp.pad(q2.T, ((0, 0), (0, pad)))
    fT = jnp.pad(F2.T, ((0, 0), (0, pad)))

    params = jnp.array(
        [sampling_time,
         sampling_time / mass,                   # precomputed on host
         drag_coefficient_1,
         drag_coefficient_2],
        dtype=jnp.float32)

    state_spec = pl.BlockSpec((2, BN), lambda i: (0, i))
    next_p_T, next_q_T = pl.pallas_call(
        _point_mass_kernel,
        grid=grid,
        in_specs=[
            pl.BlockSpec(memory_space=pltpu.MemorySpace.SMEM),  # params (4,)
            state_spec,                                          # p  (2, Bp)
            state_spec,                                          # q  (2, Bp)
            state_spec,                                          # F  (2, Bp)
        ],
        out_specs=[
            pl.BlockSpec((2, BN), lambda i: (0, i)),             # next_p
            pl.BlockSpec((2, BN), lambda i: (0, i)),             # next_q
        ],
        out_shape=[
            jax.ShapeDtypeStruct((2, Bp), jnp.float32),
            jax.ShapeDtypeStruct((2, Bp), jnp.float32),
        ],
        compiler_params=pltpu.CompilerParams(
            dimension_semantics=("parallel",)),
    )(params, pT, qT, fT)

    next_p = next_p_T[:, :B].T   # (B, 2)
    next_q = next_q_T[:, :B].T
    if single:
        next_p = next_p.reshape(2)
        next_q = next_q.reshape(2)
    return next_p, next_q


def _reference_forward(p, q, F, *, mass, Ts, b1, b2):
    cq = b1 + b2 * jnp.linalg.norm(q, axis=-1, keepdims=True)
    next_p = p + Ts * q
    next_q = q + Ts * (1.0 / mass) * (-cq * q + F)
    return next_p, next_q


if __name__ == "__main__":
    mass = 2.0
    sampling_time = 0.1
    drag_coefficient_1 = 0.5
    drag_coefficient_2 = 0.25

    key = jax.random.PRNGKey(0)

    # --- Single-vehicle case (matches the original module interface) ---
    kp, kq, kf = jax.random.split(key, 3)
    p1 = jax.random.normal(kp, (2,), dtype=jnp.float32)
    q1 = jax.random.normal(kq, (2,), dtype=jnp.float32)
    F1 = jax.random.normal(kf, (2,), dtype=jnp.float32)

    np1, nq1 = point_mass_forward(
        p1, q1, F1, mass=mass, sampling_time=sampling_time,
        drag_coefficient_1=drag_coefficient_1,
        drag_coefficient_2=drag_coefficient_2)
    jax.block_until_ready((np1, nq1))

    rp1, rq1 = _reference_forward(p1, q1, F1, mass=mass, Ts=sampling_time,
                                  b1=drag_coefficient_1, b2=drag_coefficient_2)
    assert jnp.allclose(np1, rp1, atol=1e-5), (np1, rp1)
    assert jnp.allclose(nq1, rq1, atol=1e-5), (nq1, rq1)

    # --- Small batched case (vehicles along the lane dimension) ---
    kbp, kbq, kbf = jax.random.split(jax.random.PRNGKey(0), 3)
    Bv = 4
    pb = jax.random.normal(kbp, (Bv, 2), dtype=jnp.float32)
    qb = jax.random.normal(kbq, (Bv, 2), dtype=jnp.float32)
    Fb = jax.random.normal(kbf, (Bv, 2), dtype=jnp.float32)

    npb, nqb = point_mass_forward(
        pb, qb, Fb, mass=mass, sampling_time=sampling_time,
        drag_coefficient_1=drag_coefficient_1,
        drag_coefficient_2=drag_coefficient_2)
    jax.block_until_ready((npb, nqb))

    rpb, rqb = _reference_forward(pb, qb, Fb, mass=mass, Ts=sampling_time,
                                  b1=drag_coefficient_1, b2=drag_coefficient_2)
    assert jnp.allclose(npb, rpb, atol=1e-5), (npb, rpb)
    assert jnp.allclose(nqb, rqb, atol=1e-5), (nqb, rqb)

    print("KERNEL_OK")
</pallas_src>

<mosaic_0001>
module attributes {stable_mosaic.version = 11 : i64} {
  func.func @_point_mass_kernel(%arg0: i32, %arg1: memref<4xf32, #tpu.memory_space<smem>>, %arg2: memref<2x128xf32, #tpu.memory_space<vmem>>, %arg3: memref<2x128xf32, #tpu.memory_space<vmem>>, %arg4: memref<2x128xf32, #tpu.memory_space<vmem>>, %arg5: memref<2x128xf32, #tpu.memory_space<vmem>>, %arg6: memref<2x128xf32, #tpu.memory_space<vmem>>) attributes {dimension_semantics = [#tpu.dimension_semantics<parallel>], iteration_bounds = array<i64: 1>, scalar_prefetch = 0 : i64, scratch_operands = 0 : i64, tpu.core_type = #tpu.core_type<tc>, window_params = [{transform_indices = @transform_0, window_bounds = array<i64: 4>}, {transform_indices = @transform_1, window_bounds = array<i64: 2, 128>}, {transform_indices = @transform_2, window_bounds = array<i64: 2, 128>}, {transform_indices = @transform_3, window_bounds = array<i64: 2, 128>}, {transform_indices = @transform_4, window_bounds = array<i64: 2, 128>}, {transform_indices = @transform_5, window_bounds = array<i64: 2, 128>}]} {
    %c0 = arith.constant 0 : index
    %0 = memref.load %arg1[%c0] : memref<4xf32, #tpu.memory_space<smem>>
    %c1 = arith.constant 1 : index
    %1 = memref.load %arg1[%c1] : memref<4xf32, #tpu.memory_space<smem>>
    %c2 = arith.constant 2 : index
    %2 = memref.load %arg1[%c2] : memref<4xf32, #tpu.memory_space<smem>>
    %c3 = arith.constant 3 : index
    %3 = memref.load %arg1[%c3] : memref<4xf32, #tpu.memory_space<smem>>
    %c0_0 = arith.constant 0 : index
    %c0_1 = arith.constant 0 : index
    %4 = vector.load %arg2[%c0_0, %c0_1] : memref<2x128xf32, #tpu.memory_space<vmem>>, vector<2x128xf32>
    %c0_2 = arith.constant 0 : index
    %c0_3 = arith.constant 0 : index
    %5 = vector.load %arg3[%c0_2, %c0_3] : memref<2x128xf32, #tpu.memory_space<vmem>>, vector<2x128xf32>
    %c0_4 = arith.constant 0 : index
    %c0_5 = arith.constant 0 : index
    %6 = vector.load %arg4[%c0_4, %c0_5] : memref<2x128xf32, #tpu.memory_space<vmem>>, vector<2x128xf32>
    %7 = vector.extract_strided_slice %5 {offsets = [0, 0], sizes = [1, 128], strides = [1, 1]} : vector<2x128xf32> to vector<1x128xf32>
    %8 = vector.extract_strided_slice %5 {offsets = [0, 0], sizes = [1, 128], strides = [1, 1]} : vector<2x128xf32> to vector<1x128xf32>
    %9 = arith.mulf %7, %8 : vector<1x128xf32>
    %10 = vector.extract_strided_slice %5 {offsets = [1, 0], sizes = [1, 128], strides = [1, 1]} : vector<2x128xf32> to vector<1x128xf32>
    %11 = vector.extract_strided_slice %5 {offsets = [1, 0], sizes = [1, 128], strides = [1, 1]} : vector<2x128xf32> to vector<1x128xf32>
    %12 = arith.mulf %10, %11 : vector<1x128xf32>
    %13 = arith.addf %9, %12 : vector<1x128xf32>
    %14 = math.sqrt %13 : vector<1x128xf32>
    %15 = vector.broadcast %3 : f32 to vector<1x128xf32>
    %16 = arith.mulf %15, %14 : vector<1x128xf32>
    %17 = vector.broadcast %2 : f32 to vector<1x128xf32>
    %18 = arith.addf %17, %16 : vector<1x128xf32>
    %19 = vector.broadcast %0 : f32 to vector<2x128xf32>
    %20 = arith.mulf %19, %5 : vector<2x128xf32>
    %21 = arith.addf %4, %20 : vector<2x128xf32>
    %c0_6 = arith.constant 0 : index
    %c0_7 = arith.constant 0 : index
    %22 = vector.load %arg5[%c0_6, %c0_7] : memref<2x128xf32, #tpu.memory_space<vmem>>, vector<2x128xf32>
    tpu.vector_store %arg5[%c0_6, %c0_7], %21 {strides = array<i32>} : memref<2x128xf32, #tpu.memory_space<vmem>>, vector<2x128xf32>,
    %23 = vector.broadcast %18 : vector<1x128xf32> to vector<2x128xf32>
    %24 = arith.mulf %23, %5 : vector<2x128xf32>
    %25 = arith.subf %6, %24 : vector<2x128xf32>
    %26 = vector.broadcast %1 : f32 to vector<2x128xf32>
    %27 = arith.mulf %26, %25 : vector<2x128xf32>
    %28 = arith.addf %5, %27 : vector<2x128xf32>
    %c0_8 = arith.constant 0 : index
    %c0_9 = arith.constant 0 : index
    %29 = vector.load %arg6[%c0_8, %c0_9] : memref<2x128xf32, #tpu.memory_space<vmem>>, vector<2x128xf32>
    tpu.vector_store %arg6[%c0_8, %c0_9], %28 {strides = array<i32>} : memref<2x128xf32, #tpu.memory_space<vmem>>, vector<2x128xf32>,
    return
  }
  func.func @transform_0(%arg0: i32) -> i32 {
    %c0_i32 = arith.constant 0 : i32
    %c0_i32_0 = arith.constant 0 : i32
    return %c0_i32 : i32
  }
  func.func @transform_1(%arg0: i32) -> (i32, i32) {
    %c0_i32 = arith.constant 0 : i32
    %c0_i32_0 = arith.constant 0 : i32
    return %c0_i32, %arg0 : i32, i32
  }
  func.func @transform_2(%arg0: i32) -> (i32, i32) {
    %c0_i32 = arith.constant 0 : i32
    %c0_i32_0 = arith.constant 0 : i32
    return %c0_i32, %arg0 : i32, i32
  }
  func.func @transform_3(%arg0: i32) -> (i32, i32) {
    %c0_i32 = arith.constant 0 : i32
    %c0_i32_0 = arith.constant 0 : i32
    return %c0_i32, %arg0 : i32, i32
  }
  func.func @transform_4(%arg0: i32) -> (i32, i32) {
    %c0_i32 = arith.constant 0 : i32
    %c0_i32_0 = arith.constant 0 : i32
    return %c0_i32, %arg0 : i32, i32
  }
  func.func @transform_5(%arg0: i32) -> (i32, i32) {
    %c0_i32 = arith.constant 0 : i32
    %c0_i32_0 = arith.constant 0 : i32
    return %c0_i32, %arg0 : i32, i32
  }
}

</mosaic_0001>

<llo_original>
// kernel: tpu_custom_call.1
$region0: #{tpu_custom_call.1}
  #allocation0 [shape = 'u32[]', space=smem, size = 0x4, offset = 0x4, fixed_abs, tag = 'smem constant byte address 0x4 - core index']
  #allocation1 [shape = 'u32[144,128]{1,0:T(1,128)}', space=vmem, size = 0x12000, scoped, tag = 'internal scratch']
  %s0 = inlined_call_operand.hbm [shape: f32[4], index: 0, kind: input, shape index: {}]
  %s1 = inlined_call_operand.vmem [shape: f32[2,128], index: 1, kind: input, shape index: {}]
  %s2 = inlined_call_operand.vmem [shape: f32[2,128], index: 2, kind: input, shape index: {}]
  %s3 = inlined_call_operand.vmem [shape: f32[2,128], index: 3, kind: input, shape index: {}]
  %s4 = inlined_call_operand.hbm [shape: f32[2,128], index: 4, kind: output, shape index: {0}]
  %s5 = inlined_call_operand.hbm [shape: f32[2,128], index: 5, kind: output, shape index: {1}]
  %6 = xla_tuple %s4, %s5
  %s7 = sld [smem:[#allocation0]]
  $region38: #{tpu_custom_call.1} parent=0
    _
  %s9 = ssub.s32 1, %s7
  %s10 = scalar_select 0, %s9, %s7
  $region1: #{tpu_custom_call.1} parent=0
    #allocation2 [shape = 'u8[512]{0}', space=smem, size = 0x200, scoped, tag = 'input window, operand 0, single buffered']
    #allocation3 [shape = 's32[1]{0}', space=sflag, size = 0x4, scoped, tag = 'scoped memory for tpu_custom_call.1']
    #allocation4 [shape = 's32[1]{0}', space=sflag, size = 0x4, scoped, tag = 'scoped memory for tpu_custom_call.1']
    #allocation5 [shape = 'u8[1024]{0}', space=vmem, size = 0x400, scoped, tag = 'output window, operand 0, single buffered']
    #allocation6 [shape = 'u8[1024]{0}', space=vmem, size = 0x400, scoped, tag = 'output window, operand 1, single buffered']
    #allocation7 [shape = 's32[1]{0}', space=sflag, size = 0x4, scoped, tag = 'scoped memory for tpu_custom_call.1']
    %11 = vsyncpa [#allocation4], 0
    %12 = vsyncpa [#allocation3], 0
    %13 = vsyncpa [#allocation7], 0
    // Predicated region
    $region2: #{tpu_custom_call.1} parent=1 // pred_check
      _
    $region3: #{tpu_custom_call.1} parent=1 // pred_check_branch
      %15 = sbr.rel (0) target = $region5
    $region4: #{tpu_custom_call.1} parent=1 // pred_region
      %s17 = ssub.s32 16, 16
      %18 = vsyncadd [#allocation4], %s17
      %21 = dma.hbm_to_smem %s0, 16, [#allocation2], [#allocation4]
    $region5: #{tpu_custom_call.1} parent=1 // pred_fallthru
      _
    // Predicated region
    $region6: #{tpu_custom_call.1} parent=1 // pred_check
      _
    $region7: #{tpu_custom_call.1} parent=1 // pred_check_branch
      %23 = sbr.rel (0) target = $region9
    $region8: #{tpu_custom_call.1} parent=1 // pred_region
      _
    $region9: #{tpu_custom_call.1} parent=1 // pred_fallthru
      _
    // Predicated region
    $region10: #{tpu_custom_call.1} parent=1 // pred_check
      _
    $region11: #{tpu_custom_call.1} parent=1 // pred_check_branch
      %25 = sbr.rel (0) target = $region13
    $region12: #{tpu_custom_call.1} parent=1 // pred_region
      _
    $region13: #{tpu_custom_call.1} parent=1 // pred_fallthru
      _
    // Predicated region
    $region14: #{tpu_custom_call.1} parent=1 // pred_check
      _
    $region15: #{tpu_custom_call.1} parent=1 // pred_check_branch
      %27 = sbr.rel (0) target = $region17
    $region16: #{tpu_custom_call.1} parent=1 // pred_region
      _
    $region17: #{tpu_custom_call.1} parent=1 // pred_fallthru
      _
    // Predicated region
    $region18: #{tpu_custom_call.1} parent=1 // pred_check
      _
    $region19: #{tpu_custom_call.1} parent=1 // pred_check_branch
      %29 = sbr.rel (0) target = $region21
    $region20: #{tpu_custom_call.1} parent=1 // pred_region
      %30 = dma.done [#allocation4], 16
    $region21: #{tpu_custom_call.1} parent=1 // pred_fallthru
      _
    %31 = sfence
    %s32 = sld [smem:[#allocation2]]
    %s33 = sld [smem:[#allocation2 + $0x1]]
    %s34 = sld [smem:[#allocation2 + $0x2]]
    %s35 = sld [smem:[#allocation2 + $0x3]]
    %v36 = vld [vmem:[%s1] sm:$0x3]
    %v37 = vld [vmem:[%s2] sm:$0x3]
    %v38 = vld [vmem:[%s3] sm:$0x3]
    %v39 = vmul.f32 %v37, %v37
    %v41 = vrot.slane %v39, 1
    %v43 = vadd.f32 %v39, %v41
    %v44 = vrsqrt.pop %v43
    %v45 = vmul.f32 %v43, %v44
    %vm46 = vcmp.eq.f32.partialorder %v43, inf
    %v47 = vsel %vm46, %v43, %v45
    %vm48 = vcmp.eq.f32.partialorder %v43, 0.0
    %v49 = vand.u32 %v43, 2147483648
    %v50 = vsel %vm48, %v49, %v47
    %v51 = vstv %s35
    %v52 = vmul.f32 %v51, %v50
    %v53 = vstv %s34
    %v54 = vadd.f32 %v53, %v52
    %v55 = vstv %s32
    %v56 = vmul.f32 %v55, %v37
    %v57 = vadd.f32 %v36, %v56
    %58 = vst [vmem:[#allocation5] sm:$0x3] %v57
    %v59 = vlaneseq
    %v60 = vshrl.u32 %v59, 7
    %v61 = vsub.s32 0, %v60
    %v62 = vrot.slane %v54, %v61
    %v63 = vmul.f32 %v62, %v37
    %v64 = vsub.f32 %v38, %v63
    %v65 = vstv %s33
    %v66 = vmul.f32 %v65, %v64
    %v67 = vadd.f32 %v37, %v66
    %68 = vst [vmem:[#allocation6] sm:$0x3] %v67
    // Predicated region
    $region22: #{tpu_custom_call.1} parent=1 // pred_check
      _
    $region23: #{tpu_custom_call.1} parent=1 // pred_check_branch
      %70 = sbr.rel (0) target = $region25
    $region24: #{tpu_custom_call.1} parent=1 // pred_region
      %s72 = ssub.s32 32, 32
      %73 = vsyncadd [#allocation3], %s72
      %s75 = sshll.u32 [#allocation5], 4
      %s76 = int_to_ptr.vmem [resolvable:$true] %s75
      %78 = dma.vmem_to_hbm [thread:$0]  %s76, 32, %s4, [#allocation3]
    $region25: #{tpu_custom_call.1} parent=1 // pred_fallthru
      _
    // Predicated region
    $region26: #{tpu_custom_call.1} parent=1 // pred_check
      _
    $region27: #{tpu_custom_call.1} parent=1 // pred_check_branch
      %80 = sbr.rel (0) target = $region29
    $region28: #{tpu_custom_call.1} parent=1 // pred_region
      %s82 = ssub.s32 32, 32
      %83 = vsyncadd [#allocation7], %s82
      %s85 = sshll.u32 [#allocation6], 4
      %s86 = int_to_ptr.vmem [resolvable:$true] %s85
      %88 = dma.vmem_to_hbm [thread:$0]  %s86, 32, %s5, [#allocation7]
    $region29: #{tpu_custom_call.1} parent=1 // pred_fallthru
      _
    // Predicated region
    $region30: #{tpu_custom_call.1} parent=1 // pred_check
      _
    $region31: #{tpu_custom_call.1} parent=1 // pred_check_branch
      %90 = sbr.rel (0) target = $region33
    $region32: #{tpu_custom_call.1} parent=1 // pred_region
      %91 = dma.done [#allocation3], 32
    $region33: #{tpu_custom_call.1} parent=1 // pred_fallthru
      _
    // Predicated region
    $region34: #{tpu_custom_call.1} parent=1 // pred_check
      _
    $region35: #{tpu_custom_call.1} parent=1 // pred_check_branch
      %93 = sbr.rel (0) target = $region37
    $region36: #{tpu_custom_call.1} parent=1 // pred_region
      %94 = dma.done [#allocation7], 32
    $region37: #{tpu_custom_call.1} parent=1 // pred_fallthru
      _
    %95 = vsyncpa [#allocation3], 1
    %96 = vsyncpa [#allocation7], 1
    %97 = vsyncpa [#allocation4], 1

</llo_original>
